<compile_context>
chip_gen: v7x
topology: tpu7x:2x2x1
jax: 0.10.0
libtpu: 0.0.40
codegen_flags: <defaults>
</compile_context>

<pallas_src>
import functools

import jax
import jax.numpy as jnp
from jax.experimental import pallas as pl
from jax.experimental.pallas import tpu as pltpu

QUANT_BITS = 12          # B in the PyTorch module
LANES = 1024             # lane-dense last dim (multiple of 128)
TILE_ROWS = 512          # 512 * 1024 * 4 B = 2 MiB per block (x2 buffers in/out)


def _quantize_kernel(x_ref, o_ref, *, scale):
    # round-half-to-even, same as torch.round
    o_ref[...] = jnp.round(scale * x_ref[...])


def _quantize_2d(x2d, rows, tile_rows, dtype, scale):
    return pl.pallas_call(
        functools.partial(_quantize_kernel, scale=scale),
        grid=(rows // tile_rows,),
        in_specs=[pl.BlockSpec((tile_rows, LANES), lambda i: (i, 0))],
        out_specs=pl.BlockSpec((tile_rows, LANES), lambda i: (i, 0)),
        out_shape=jax.ShapeDtypeStruct((rows, LANES), dtype),
        compiler_params=pltpu.CompilerParams(
            dimension_semantics=("parallel",),   # megacore sharding on v7x
            vmem_limit_bytes=32 * 1024 * 1024,   # explicit, safe on v5e/v6e/v7x
        ),
    )(x2d)


@functools.partial(jax.jit, static_argnames=("bits",))
def _quantize(y_rot, bits=QUANT_BITS):
    scale = float(2 ** (bits - 1))
    shape = y_rot.shape
    dtype = y_rot.dtype
    total = y_rot.size

    # Flatten -> pad -> lane-dense (rows, LANES) slab.  All sizes are static.
    rows = pl.cdiv(total, LANES)
    rows = ((rows + 7) // 8) * 8                       # sublane multiple of 8
    tile_rows = min(TILE_ROWS, rows)                   # adapt to tiny inputs
    rows = ((rows + tile_rows - 1) // tile_rows) * tile_rows
    padded = rows * LANES

    flat = jnp.ravel(y_rot)
    flat = jnp.pad(flat, (0, padded - total))
    out2d = _quantize_2d(flat.reshape(rows, LANES), rows, tile_rows, dtype, scale)
    return out2d.reshape(-1)[:total].reshape(shape)


def quantization_block(y_rot):
    """Forward of QuantizationBlock: (round(2**(B-1) * y_rot), B) with B=12."""
    return _quantize(y_rot, QUANT_BITS), QUANT_BITS


if __name__ == "__main__":
    key = jax.random.PRNGKey(0)
    # y_rot as produced by the surrounding autoencoder: (N, 32, (image//8)**2)
    y_rot = jax.random.normal(key, (2, 32, 64), dtype=jnp.float32)

    y_tag, B = quantization_block(y_rot)
    jax.block_until_ready(y_tag)

    assert B == 12
    assert y_tag.shape == y_rot.shape and y_tag.dtype == y_rot.dtype
    ref = jnp.round((2.0 ** (B - 1)) * y_rot)
    assert bool(jnp.array_equal(y_tag, ref)), "mismatch vs jnp reference"
    print("KERNEL_OK")
</pallas_src>

<mosaic_0001>
module attributes {stable_mosaic.version = 11 : i64} {
  func.func @_quantize_kernel(%arg0: i32, %arg1: memref<8x1024xf32, #tpu.memory_space<vmem>>, %arg2: memref<8x1024xf32, #tpu.memory_space<vmem>>) attributes {dimension_semantics = [#tpu.dimension_semantics<parallel>], iteration_bounds = array<i64: 1>, scalar_prefetch = 0 : i64, scratch_operands = 0 : i64, tpu.core_type = #tpu.core_type<tc>, window_params = [{transform_indices = @transform_0, window_bounds = array<i64: 8, 1024>}, {transform_indices = @transform_1, window_bounds = array<i64: 8, 1024>}]} {
    %c0 = arith.constant 0 : index
    %c0_0 = arith.constant 0 : index
    %0 = vector.load %arg1[%c0, %c0_0] : memref<8x1024xf32, #tpu.memory_space<vmem>>, vector<8x1024xf32>
    %cst = arith.constant 2.048000e+03 : f32
    %1 = vector.broadcast %cst : f32 to vector<8x1024xf32>
    %2 = arith.mulf %1, %0 : vector<8x1024xf32>
    %3 = math.roundeven %2 : vector<8x1024xf32>
    %c0_1 = arith.constant 0 : index
    %c0_2 = arith.constant 0 : index
    %4 = vector.load %arg2[%c0_1, %c0_2] : memref<8x1024xf32, #tpu.memory_space<vmem>>, vector<8x1024xf32>
    tpu.vector_store %arg2[%c0_1, %c0_2], %3 {strides = array<i32>} : memref<8x1024xf32, #tpu.memory_space<vmem>>, vector<8x1024xf32>,
    return
  }
  func.func @transform_0(%arg0: i32) -> (i32, i32) {
    %c0_i32 = arith.constant 0 : i32
    %c0_i32_0 = arith.constant 0 : i32
    return %arg0, %c0_i32 : i32, i32
  }
  func.func @transform_1(%arg0: i32) -> (i32, i32) {
    %c0_i32 = arith.constant 0 : i32
    %c0_i32_0 = arith.constant 0 : i32
    return %arg0, %c0_i32 : i32, i32
  }
}

</mosaic_0001>

<llo_original>
// kernel: _quantize.1
$region0: #{_quantize.1}
  #allocation0 [shape = 'u32[]', space=smem, size = 0x4, offset = 0x4, fixed_abs, tag = 'smem constant byte address 0x4 - core index']
  #allocation1 [shape = 'u32[144,128]{1,0:T(1,128)}', space=vmem, size = 0x12000, scoped, tag = 'internal scratch']
  %s0 = inlined_call_operand.vmem [shape: f32[8,1024], index: 0, kind: input, shape index: {}]
  %s1 = inlined_call_operand.vmem [shape: f32[8,1024], index: 1, kind: output, shape index: {}]
  %s2 = sld [smem:[#allocation0]]
  $region14: #{_quantize.1} parent=0
    _
  %s4 = ssub.s32 1, %s2
  %s5 = scalar_select 0, %s4, %s2
  // Predicated region
  $region2: #{_quantize.1} parent=0 // pred_check
    _
  $region3: #{_quantize.1} parent=0 // pred_check_branch
    %7 = sbr.rel (0) target = $region5
  $region4: #{_quantize.1} parent=0 // pred_region
    _
  $region5: #{_quantize.1} parent=0 // pred_fallthru
    _
  %v8 = vld [vmem:[%s0] sm:$0xff]
  %v9 = vld [vmem:[%s0 + $0x8] sm:$0xff]
  %v10 = vld [vmem:[%s0 + $0x10] sm:$0xff]
  %v11 = vld [vmem:[%s0 + $0x18] sm:$0xff]
  %v12 = vld [vmem:[%s0 + $0x20] sm:$0xff]
  %v13 = vld [vmem:[%s0 + $0x28] sm:$0xff]
  %v14 = vld [vmem:[%s0 + $0x30] sm:$0xff]
  %v15 = vld [vmem:[%s0 + $0x38] sm:$0xff]
  %v16 = vmul.f32 %v8, 2048.0
  %v17 = vmul.f32 %v9, 2048.0
  %v18 = vmul.f32 %v10, 2048.0
  %v19 = vmul.f32 %v11, 2048.0
  %v20 = vmul.f32 %v12, 2048.0
  %v21 = vmul.f32 %v13, 2048.0
  %v22 = vmul.f32 %v14, 2048.0
  %v23 = vmul.f32 %v15, 2048.0
  %v24 = vround.ne.pseudo %v16
  %v25 = vround.ne.pseudo %v17
  %v26 = vround.ne.pseudo %v18
  %v27 = vround.ne.pseudo %v19
  %v28 = vround.ne.pseudo %v20
  %v29 = vround.ne.pseudo %v21
  %v30 = vround.ne.pseudo %v22
  %v31 = vround.ne.pseudo %v23
  %32 = vst [vmem:[%s1] sm:$0xff] %v24
  %33 = vst [vmem:[%s1 + $0x8] sm:$0xff] %v25
  %34 = vst [vmem:[%s1 + $0x10] sm:$0xff] %v26
  %35 = vst [vmem:[%s1 + $0x18] sm:$0xff] %v27
  %36 = vst [vmem:[%s1 + $0x20] sm:$0xff] %v28
  %37 = vst [vmem:[%s1 + $0x28] sm:$0xff] %v29
  %38 = vst [vmem:[%s1 + $0x30] sm:$0xff] %v30
  %39 = vst [vmem:[%s1 + $0x38] sm:$0xff] %v31
  // Predicated region
  $region6: #{_quantize.1} parent=0 // pred_check
    _
  $region7: #{_quantize.1} parent=0 // pred_check_branch
    %41 = sbr.rel (0) target = $region9
  $region8: #{_quantize.1} parent=0 // pred_region
    _
  $region9: #{_quantize.1} parent=0 // pred_fallthru
    _
  // Predicated region
  $region10: #{_quantize.1} parent=0 // pred_check
    _
  $region11: #{_quantize.1} parent=0 // pred_check_branch
    %43 = sbr.rel (0) target = $region13
  $region12: #{_quantize.1} parent=0 // pred_region
    _
  $region13: #{_quantize.1} parent=0 // pred_fallthru
    _

</llo_original>
